<compile_context>
chip_gen: v5e
topology: v5e:2x2
jax: 0.10.0
libtpu: 0.0.40
codegen_flags: <defaults>
</compile_context>

<pallas_src>
import functools

import jax
import jax.numpy as jnp
from jax.experimental import pallas as pl
from jax.experimental.pallas import tpu as pltpu

_NEG_SLOPE = 0.01
_LANE = 128
_SUBLANE = 8
_TILE_CHOICES = (8, 16, 32, 64, 128, 256)


def _round_up(x, m):
    return (x + m - 1) // m * m


def _choose_batch_tile(batch):
    """Quantized power-of-two batch tiles (bounded recompiles, grid>=2 for big B)."""
    for t in _TILE_CHOICES:
        if t >= batch:
            return t
    return _TILE_CHOICES[-1]


# ----------------------------------------------------------------------------
# Host-side parameter packing: one lane-dense slab (default bf16).
#
# Lane width = max over padded OUT dims.  Layout (all paddings zero, so padded
# lanes/rows stay exactly zero through every layer):
#   per hidden layer i : round_up(in_i,128) rows of W_i, then 8 rows (row0=b_i)
#   final              : round_up(in_f,128) rows of W_final
#   passthrough (opt.) : round_up(state,128) rows of W_pass
#   bias               : 8 rows (row0 = b_final [+ b_pass])
# ----------------------------------------------------------------------------
def pack_param_actor(params, *, skip_zero_passthrough=False, dtype=jnp.bfloat16):
    hidden = params["hidden"]
    wf, bf = params["final"]
    wp, bp = params["passthrough"]

    state_size = int(wp.shape[0])
    ap_size = int(wf.shape[1])
    state_pad = _round_up(state_size, _LANE)
    out_pad = _round_up(ap_size, _LANE)

    hidden_pads = []
    in_dim = state_size
    for (w, _) in hidden:
        hidden_pads.append((_round_up(in_dim, _LANE), _round_up(int(w.shape[1]), _LANE)))
        in_dim = int(w.shape[1])
    final_pads = (_round_up(in_dim, _LANE), out_pad)

    if skip_zero_passthrough:
        # Skipping is only valid for the module's frozen all-zero passthrough.
        assert (not bool(jnp.any(wp != 0))) and (not bool(jnp.any(bp != 0))), (
            "skip_zero_passthrough=True requires an all-zero passthrough layer")
        pt_pads = None
    else:
        pt_pads = (state_pad, out_pad)

    lane = max([c for (_, c) in hidden_pads] + [out_pad])

    def wblock(w, rows):
        in_d, out_d = w.shape
        return jnp.zeros((rows, lane), dtype).at[:in_d, :out_d].set(w.astype(dtype))

    def brow(b):
        b = jnp.asarray(b).reshape(-1)
        return jnp.zeros((_SUBLANE, lane), dtype).at[0, : b.shape[0]].set(b.astype(dtype))

    blocks = []
    for (w, b), (rin, _) in zip(hidden, hidden_pads):
        blocks.append(wblock(w, rin))
        blocks.append(brow(b))
    blocks.append(wblock(wf, final_pads[0]))
    if pt_pads is not None:
        blocks.append(wblock(wp, state_pad))
        blocks.append(brow(jnp.asarray(bf).reshape(-1) + jnp.asarray(bp).reshape(-1)))
    else:
        blocks.append(brow(bf))

    slab = jnp.concatenate(blocks, axis=0)
    meta = dict(hidden_pads=tuple(hidden_pads), final_pads=final_pads,
                pt_pads=pt_pads, ap_size=ap_size, state_size=state_size,
                state_pad=state_pad, out_pad=out_pad)
    return slab, meta


# ----------------------------------------------------------------------------
# Kernel: all shapes/offsets are static Python ints; matmul inputs are the
# slab dtype (bf16 fast path), accumulation is f32.
# ----------------------------------------------------------------------------
def _make_kernel(hidden_pads, final_pads, pt_pads, negative_slope=_NEG_SLOPE):
    # leaky_relu as max(z, a*z) is only valid for 0 <= a < 1.
    assert 0.0 <= negative_slope < 1.0

    def kernel(x_ref, slab_ref, o_ref):
        cdt = x_ref.dtype                      # matmul input dtype (bf16 / f32)
        x = x_ref[...]                         # (TB, state_pad), zero-padded lanes
        h = x
        off = 0
        for (rin, cout) in hidden_pads:
            w = slab_ref[off:off + rin, :cout]
            b = slab_ref[off + rin:off + rin + 1, :cout]
            off += rin + _SUBLANE
            z = jnp.dot(h, w, preferred_element_type=jnp.float32) + b
            h = jnp.maximum(z, negative_slope * z).astype(cdt)   # leaky_relu(0.01)

        rin, cout = final_pads
        wf = slab_ref[off:off + rin, :cout]
        off += rin
        acc = jnp.dot(h, wf, preferred_element_type=jnp.float32)
        if pt_pads is not None:
            prin, pcout = pt_pads
            wp = slab_ref[off:off + prin, :pcout]
            off += prin
            acc = acc + jnp.dot(x, wp, preferred_element_type=jnp.float32)
        b = slab_ref[off:off + 1, :cout]
        o_ref[...] = (acc + b).astype(o_ref.dtype)

    return kernel


# ----------------------------------------------------------------------------
# Wrapper
# ----------------------------------------------------------------------------
@functools.partial(
    jax.jit,
    static_argnames=("hidden_pads", "final_pads", "pt_pads", "ap_size",
                     "state_pad", "out_pad", "batch_tile"))
def _param_actor_forward_impl(state, slab, *, hidden_pads, final_pads, pt_pads,
                              ap_size, state_pad, out_pad, batch_tile):
    B, S = state.shape
    B_pad = _round_up(max(B, 1), batch_tile)

    # Pad the state directly in the slab dtype to only round_up(S,128) lanes.
    xp = jnp.zeros((B_pad, state_pad), slab.dtype).at[:B, :S].set(
        state.astype(slab.dtype))

    kernel = _make_kernel(hidden_pads, final_pads, pt_pads)
    slab_rows, lane = slab.shape
    grid = (B_pad // batch_tile,)

    out = pl.pallas_call(
        kernel,
        out_shape=jax.ShapeDtypeStruct((B_pad, out_pad), jnp.float32),
        grid=grid,
        in_specs=[
            pl.BlockSpec((batch_tile, state_pad), lambda i: (i, 0)),  # state tile
            pl.BlockSpec((slab_rows, lane), lambda i: (0, 0)),        # resident params
        ],
        out_specs=pl.BlockSpec((batch_tile, out_pad), lambda i: (i, 0)),
        compiler_params=pltpu.CompilerParams(
            dimension_semantics=("parallel",),
            vmem_limit_bytes=32 * 1024 * 1024),
    )(xp, slab)

    return out[:B, :ap_size]


def param_actor_forward(state, slab, meta, *, batch_tile=None):
    """Fused ParamActor forward. `slab, meta` come from pack_param_actor."""
    B = state.shape[0]
    if batch_tile is None:
        batch_tile = _choose_batch_tile(B)
    batch_tile = _round_up(batch_tile, _SUBLANE)
    return _param_actor_forward_impl(
        state, slab,
        hidden_pads=meta["hidden_pads"], final_pads=meta["final_pads"],
        pt_pads=meta["pt_pads"], ap_size=meta["ap_size"],
        state_pad=meta["state_pad"], out_pad=meta["out_pad"],
        batch_tile=batch_tile)


# ----------------------------------------------------------------------------
# Parameter init mirroring ParamActor.__init__ (init_type='kaiming').
# Weights are stored transposed vs PyTorch, i.e. (in_features, out_features).
# ----------------------------------------------------------------------------
def init_param_actor(key, state_size, action_parameter_size, hidden_layers,
                     activation="leaky_relu", output_layer_init_std=None):
    negative_slope = 0.01
    gain = (jnp.sqrt(2.0 / (1.0 + negative_slope ** 2))
            if activation == "leaky_relu" else jnp.sqrt(2.0))

    keys = jax.random.split(key, len(hidden_layers) + 1)
    hidden = []
    in_dim = state_size
    for i, h in enumerate(hidden_layers):
        std = gain / jnp.sqrt(jnp.float32(in_dim))   # fan_in = in_features
        w = jax.random.normal(keys[i], (in_dim, h), jnp.float32) * std
        b = jnp.zeros((1, h), jnp.float32)
        hidden.append((w, b))
        in_dim = h

    if output_layer_init_std is not None:
        wf = jax.random.normal(
            keys[-1], (in_dim, action_parameter_size), jnp.float32
        ) * output_layer_init_std
    else:
        wf = jnp.zeros((in_dim, action_parameter_size), jnp.float32)
    bf = jnp.zeros((1, action_parameter_size), jnp.float32)

    # Passthrough layer: frozen zeros in the PyTorch module.
    wp = jnp.zeros((state_size, action_parameter_size), jnp.float32)
    bp = jnp.zeros((1, action_parameter_size), jnp.float32)

    return {"hidden": hidden, "final": (wf, bf), "passthrough": (wp, bp)}


# ----------------------------------------------------------------------------
# References
# ----------------------------------------------------------------------------
def _reference_forward(state, params, negative_slope=_NEG_SLOPE):
    x = state
    for (w, b) in params["hidden"]:
        x = x @ w + b
        x = jnp.where(x > 0, x, negative_slope * x)
    wf, bf = params["final"]
    ap = x @ wf + bf
    wp, bp = params["passthrough"]
    return ap + (state @ wp + bp)


def _reference_forward_cast(state, params, dtype, negative_slope=_NEG_SLOPE):
    """Mirrors the kernel's cast points: dtype matmul inputs, f32 accumulation."""
    x = state.astype(dtype)
    h = x
    for (w, b) in params["hidden"]:
        z = jnp.dot(h, w.astype(dtype), preferred_element_type=jnp.float32)
        z = z + jnp.asarray(b).reshape(1, -1).astype(dtype)
        h = jnp.maximum(z, negative_slope * z).astype(dtype)
    wf, bf = params["final"]
    wp, bp = params["passthrough"]
    acc = jnp.dot(h, wf.astype(dtype), preferred_element_type=jnp.float32)
    acc = acc + jnp.dot(x, wp.astype(dtype), preferred_element_type=jnp.float32)
    b_all = (jnp.asarray(bf).reshape(1, -1) + jnp.asarray(bp).reshape(1, -1)).astype(dtype)
    return acc + b_all


if __name__ == "__main__":
    batch = 8
    state_size = 16
    action_parameter_size = 8
    hidden_layers = (32, 32)

    key = jax.random.PRNGKey(0)
    k_params, k_state, k_pt, k_state2 = jax.random.split(key, 4)

    params = init_param_actor(
        k_params, state_size, action_parameter_size, hidden_layers,
        activation="leaky_relu", output_layer_init_std=0.1)
    state = jax.random.normal(k_state, (batch, state_size), jnp.float32)
    ref_f32 = _reference_forward(state, params)

    # Path 1: module-faithful (frozen-zero passthrough), f32 slab -> tight check.
    slab_f32, meta_f32 = pack_param_actor(params, skip_zero_passthrough=True,
                                          dtype=jnp.float32)
    out_f32 = jax.block_until_ready(param_actor_forward(state, slab_f32, meta_f32))
    assert out_f32.shape == (batch, action_parameter_size)
    assert jnp.allclose(out_f32, ref_f32, atol=1e-5, rtol=1e-5), "f32 skip-path mismatch"

    # Path 2: bf16 slab (default fast path) vs a cast-matched reference.
    slab_bf, meta_bf = pack_param_actor(params, skip_zero_passthrough=True)
    out_bf = jax.block_until_ready(param_actor_forward(state, slab_bf, meta_bf))
    ref_bf = _reference_forward_cast(state, params, jnp.bfloat16)
    assert jnp.allclose(out_bf, ref_bf, atol=1e-2, rtol=1e-2), "bf16 skip-path mismatch"

    # Path 3: nonzero passthrough -> general two-dot path, f32 tight check.
    kp1, kp2 = jax.random.split(k_pt)
    params_pt = dict(params)
    params_pt["passthrough"] = (
        jax.random.normal(kp1, (state_size, action_parameter_size),
                          jnp.float32) * 0.1,
        jax.random.normal(kp2, (1, action_parameter_size), jnp.float32) * 0.1,
    )
    slab_pt32, meta_pt32 = pack_param_actor(params_pt, dtype=jnp.float32)
    out_pt32 = jax.block_until_ready(param_actor_forward(state, slab_pt32, meta_pt32))
    ref_pt32 = _reference_forward(state, params_pt)
    assert jnp.allclose(out_pt32, ref_pt32, atol=1e-5, rtol=1e-5), "f32 passthrough mismatch"

    # Path 4: bf16 + larger stacked batch -> multi-step "parallel" grid
    # (>= 2 steps so both v7x TensorCores are used; single serial loop on v5e/v6e).
    big_state = jax.random.normal(k_state2, (320, state_size), jnp.float32)
    slab_pt16, meta_pt16 = pack_param_actor(params_pt)
    out_big = jax.block_until_ready(param_actor_forward(big_state, slab_pt16, meta_pt16))
    ref_big = _reference_forward_cast(big_state, params_pt, jnp.bfloat16)
    assert jnp.allclose(out_big, ref_big, atol=1e-2, rtol=1e-2), "grid path mismatch"

    print("KERNEL_OK")
</pallas_src>

<mosaic_0001>
module attributes {stable_mosaic.version = 11 : i64} {
  func.func @kernel(%arg0: i32, %arg1: memref<8x128xf32, #tpu.memory_space<vmem>>, %arg2: memref<408x128xf32, #tpu.memory_space<vmem>>, %arg3: memref<8x128xf32, #tpu.memory_space<vmem>>) attributes {dimension_semantics = [#tpu.dimension_semantics<parallel>], iteration_bounds = array<i64: 1>, scalar_prefetch = 0 : i64, scratch_operands = 0 : i64, tpu.core_type = #tpu.core_type<tc>, window_params = [{transform_indices = @transform_0, window_bounds = array<i64: 8, 128>}, {pipeline_mode = #tpu.pipeline_mode<synchronous>, transform_indices = @transform_1, window_bounds = array<i64: 408, 128>}, {transform_indices = @transform_2, window_bounds = array<i64: 8, 128>}]} {
    %c0 = arith.constant 0 : index
    %c0_0 = arith.constant 0 : index
    %0 = vector.load %arg1[%c0, %c0_0] : memref<8x128xf32, #tpu.memory_space<vmem>>, vector<8x128xf32>
    %c0_1 = arith.constant 0 : index
    %c0_2 = arith.constant 0 : index
    %1 = vector.load %arg2[%c0_1, %c0_2] : memref<408x128xf32, #tpu.memory_space<vmem>>, vector<128x128xf32>
    %c128 = arith.constant 128 : index
    %c0_3 = arith.constant 0 : index
    %2 = vector.load %arg2[%c128, %c0_3] : memref<408x128xf32, #tpu.memory_space<vmem>>, vector<1x128xf32>
    %cst = arith.constant dense<0.000000e+00> : vector<8x128xf32>
    %3 = tpu.matmul %0, %1, %cst {dimension_numbers = #tpu.dot_dimension_numbers<[1], [0], [0], [1], [0, 0, 1, 1], [], []>} : vector<8x128xf32>, vector<128x128xf32>, vector<8x128xf32> -> vector<8x128xf32>
    %4 = vector.broadcast %2 : vector<1x128xf32> to vector<8x128xf32>
    %5 = arith.addf %3, %4 : vector<8x128xf32>
    %cst_4 = arith.constant 0.00999999977 : f32
    %6 = vector.broadcast %cst_4 : f32 to vector<8x128xf32>
    %7 = arith.mulf %6, %5 : vector<8x128xf32>
    %8 = arith.maximumf %5, %7 : vector<8x128xf32>
    %c136 = arith.constant 136 : index
    %c0_5 = arith.constant 0 : index
    %9 = vector.load %arg2[%c136, %c0_5] : memref<408x128xf32, #tpu.memory_space<vmem>>, vector<128x128xf32>
    %c264 = arith.constant 264 : index
    %c0_6 = arith.constant 0 : index
    %10 = vector.load %arg2[%c264, %c0_6] : memref<408x128xf32, #tpu.memory_space<vmem>>, vector<1x128xf32>
    %cst_7 = arith.constant dense<0.000000e+00> : vector<8x128xf32>
    %11 = tpu.matmul %8, %9, %cst_7 {dimension_numbers = #tpu.dot_dimension_numbers<[1], [0], [0], [1], [0, 0, 1, 1], [], []>} : vector<8x128xf32>, vector<128x128xf32>, vector<8x128xf32> -> vector<8x128xf32>
    %12 = vector.broadcast %10 : vector<1x128xf32> to vector<8x128xf32>
    %13 = arith.addf %11, %12 : vector<8x128xf32>
    %cst_8 = arith.constant 0.00999999977 : f32
    %14 = vector.broadcast %cst_8 : f32 to vector<8x128xf32>
    %15 = arith.mulf %14, %13 : vector<8x128xf32>
    %16 = arith.maximumf %13, %15 : vector<8x128xf32>
    %c272 = arith.constant 272 : index
    %c0_9 = arith.constant 0 : index
    %17 = vector.load %arg2[%c272, %c0_9] : memref<408x128xf32, #tpu.memory_space<vmem>>, vector<128x128xf32>
    %cst_10 = arith.constant dense<0.000000e+00> : vector<8x128xf32>
    %18 = tpu.matmul %16, %17, %cst_10 {dimension_numbers = #tpu.dot_dimension_numbers<[1], [0], [0], [1], [0, 0, 1, 1], [], []>} : vector<8x128xf32>, vector<128x128xf32>, vector<8x128xf32> -> vector<8x128xf32>
    %c400 = arith.constant 400 : index
    %c0_11 = arith.constant 0 : index
    %19 = vector.load %arg2[%c400, %c0_11] : memref<408x128xf32, #tpu.memory_space<vmem>>, vector<1x128xf32>
    %20 = vector.broadcast %19 : vector<1x128xf32> to vector<8x128xf32>
    %21 = arith.addf %18, %20 : vector<8x128xf32>
    %c0_12 = arith.constant 0 : index
    %c0_13 = arith.constant 0 : index
    %22 = vector.load %arg3[%c0_12, %c0_13] : memref<8x128xf32, #tpu.memory_space<vmem>>, vector<8x128xf32>
    tpu.vector_store %arg3[%c0_12, %c0_13], %21 {strides = array<i32>} : memref<8x128xf32, #tpu.memory_space<vmem>>, vector<8x128xf32>,
    return
  }
  func.func @transform_0(%arg0: i32) -> (i32, i32) {
    %c0_i32 = arith.constant 0 : i32
    %c0_i32_0 = arith.constant 0 : i32
    return %arg0, %c0_i32 : i32, i32
  }
  func.func @transform_1(%arg0: i32) -> (i32, i32) {
    %c0_i32 = arith.constant 0 : i32
    %c0_i32_0 = arith.constant 0 : i32
    %c0_i32_1 = arith.constant 0 : i32
    return %c0_i32, %c0_i32_0 : i32, i32
  }
  func.func @transform_2(%arg0: i32) -> (i32, i32) {
    %c0_i32 = arith.constant 0 : i32
    %c0_i32_0 = arith.constant 0 : i32
    return %arg0, %c0_i32 : i32, i32
  }
}

</mosaic_0001>

<llo_original>
// kernel: _param_actor_forward_impl.1
$region0: #{_param_actor_forward_impl.1}
  #allocation0 [shape = 'u32[]', space=smem, size = 0x4, offset = 0x4, fixed_abs, tag = 'smem constant byte address 0x4 - core index']
  #allocation1 [shape = 'u32[72,128]{1,0:T(1,128)}', space=vmem, size = 0x9000, scoped, tag = 'internal scratch']
  %s0 = inlined_call_operand.vmem [shape: f32[8,128], index: 0, kind: input, shape index: {}]
  %s1 = inlined_call_operand.hbm [shape: f32[408,128], index: 1, kind: input, shape index: {}]
  %s2 = inlined_call_operand.hbm [shape: f32[8,128], index: 2, kind: output, shape index: {}]
  %s3 = sld [smem:[#allocation0]]
  $region22: #{_param_actor_forward_impl.1} parent=0
    _
  %s5 = ssub.s32 1, %s3
  %s6 = scalar_select 0, %s5, %s3
  $region1: #{_param_actor_forward_impl.1} parent=0
    #allocation2 [shape = 'u8[208896]{0}', space=vmem, size = 0x33000, scoped, tag = 'input window, operand 1, single buffered']
    #allocation3 [shape = 's32[1]{0}', space=sflag, size = 0x4, scoped, tag = 'scoped memory for _param_actor_forward_impl.1']
    #allocation4 [shape = 's32[1]{0}', space=sflag, size = 0x4, scoped, tag = 'scoped memory for _param_actor_forward_impl.1']
    #allocation5 [shape = 'u8[4096]{0}', space=vmem, size = 0x1000, scoped, tag = 'output window, operand 0, single buffered']
    %7 = vsyncpa [#allocation3], 0
    %8 = vsyncpa [#allocation4], 0
    // Predicated region
    $region2: #{_param_actor_forward_impl.1} parent=1 // pred_check
      _
    $region3: #{_param_actor_forward_impl.1} parent=1 // pred_check_branch
      %10 = sbr.rel (0) target = $region5
    $region4: #{_param_actor_forward_impl.1} parent=1 // pred_region
      _
    $region5: #{_param_actor_forward_impl.1} parent=1 // pred_fallthru
      _
    // Predicated region
    $region6: #{_param_actor_forward_impl.1} parent=1 // pred_check
      _
    $region7: #{_param_actor_forward_impl.1} parent=1 // pred_check_branch
      %12 = sbr.rel (0) target = $region9
    $region8: #{_param_actor_forward_impl.1} parent=1 // pred_region
      %14 = vsyncadd [#allocation3], 0
      %s15 = sshll.u32 %s1, 4
      %s16 = int_to_ptr.hbm [resolvable:$true] %s15
      %s17 = sshll.u32 [#allocation2], 4
      %s18 = int_to_ptr.vmem [resolvable:$true] %s17
      %23 = dma.hbm_to_vmem [thread:$0]  %s16, 6528, %s18, [#allocation3], 128, 128, 8
    $region9: #{_param_actor_forward_impl.1} parent=1 // pred_fallthru
      _
    // Predicated region
    $region10: #{_param_actor_forward_impl.1} parent=1 // pred_check
      _
    $region11: #{_param_actor_forward_impl.1} parent=1 // pred_check_branch
      %25 = sbr.rel (0) target = $region13
    $region12: #{_param_actor_forward_impl.1} parent=1 // pred_region
      %27 = dma.done [#allocation3], 6528
    $region13: #{_param_actor_forward_impl.1} parent=1 // pred_fallthru
      _
    %v28 = vld [vmem:[%s0] sm:$0xff]
    %v29 = vld [vmem:[#allocation2] sm:$0xff]
    %v30 = vld [vmem:[#allocation2 + $0x8] sm:$0xff]
    %v31 = vld [vmem:[#allocation2 + $0x10] sm:$0xff]
    %v32 = vld [vmem:[#allocation2 + $0x18] sm:$0xff]
    %v33 = vld [vmem:[#allocation2 + $0x20] sm:$0xff]
    %v34 = vld [vmem:[#allocation2 + $0x28] sm:$0xff]
    %v35 = vld [vmem:[#allocation2 + $0x30] sm:$0xff]
    %v36 = vld [vmem:[#allocation2 + $0x38] sm:$0xff]
    %v37 = vld [vmem:[#allocation2 + $0x40] sm:$0xff]
    %v38 = vld [vmem:[#allocation2 + $0x48] sm:$0xff]
    %v39 = vld [vmem:[#allocation2 + $0x50] sm:$0xff]
    %v40 = vld [vmem:[#allocation2 + $0x58] sm:$0xff]
    %v41 = vld [vmem:[#allocation2 + $0x60] sm:$0xff]
    %v42 = vld [vmem:[#allocation2 + $0x68] sm:$0xff]
    %v43 = vld [vmem:[#allocation2 + $0x70] sm:$0xff]
    %v44 = vld [vmem:[#allocation2 + $0x78] sm:$0xff]
    %v45 = vld [vmem:[#allocation2 + $0x80] sm:$0x1]
    %v46 = vperm.slane %v45, 0
    %47 = vmatpush.msra.mxu0 %v44
    %48 = vmatpush.msra.mxu0 %v43
    %49 = vmatpush.msra.mxu0 %v42
    %50 = vmatpush.msra.mxu0 %v41
    %51 = vmatpush.msra.mxu0 %v40
    %52 = vmatpush.msra.mxu0 %v39
    %53 = vmatpush.msra.mxu0 %v38
    %54 = vmatpush.msra.mxu0 %v37
    %55 = vmatpush.msra.mxu0 %v36
    %56 = vmatpush.msra.mxu0 %v35
    %57 = vmatpush.msra.mxu0 %v34
    %58 = vmatpush.msra.mxu0 %v33
    %59 = vmatpush.msra.mxu0 %v32
    %60 = vmatpush.msra.mxu0 %v31
    %61 = vmatpush.msra.mxu0 %v30
    %62 = vmatpush.msra.mxu0 %v29
    %63 = vmatmul.f32.gmra.mxu0 %v28
    %v64 = vpop.f32.mrf.mxu0
    %v65 = vadd.f32 %v46, %v64
    %66 = vdwg.mxu0
    %v67 = vmul.f32 %v65, 0.01
    %v68 = vmax.f32 %v65, %v67
    %v69 = vld [vmem:[#allocation2 + $0x88] sm:$0xff]
    %v70 = vld [vmem:[#allocation2 + $0x90] sm:$0xff]
    %v71 = vld [vmem:[#allocation2 + $0x98] sm:$0xff]
    %v72 = vld [vmem:[#allocation2 + $0xa0] sm:$0xff]
    %v73 = vld [vmem:[#allocation2 + $0xa8] sm:$0xff]
    %v74 = vld [vmem:[#allocation2 + $0xb0] sm:$0xff]
    %v75 = vld [vmem:[#allocation2 + $0xb8] sm:$0xff]
    %v76 = vld [vmem:[#allocation2 + $0xc0] sm:$0xff]
    %v77 = vld [vmem:[#allocation2 + $0xc8] sm:$0xff]
    %v78 = vld [vmem:[#allocation2 + $0xd0] sm:$0xff]
    %v79 = vld [vmem:[#allocation2 + $0xd8] sm:$0xff]
    %v80 = vld [vmem:[#allocation2 + $0xe0] sm:$0xff]
    %v81 = vld [vmem:[#allocation2 + $0xe8] sm:$0xff]
    %v82 = vld [vmem:[#allocation2 + $0xf0] sm:$0xff]
    %v83 = vld [vmem:[#allocation2 + $0xf8] sm:$0xff]
    %v84 = vld [vmem:[#allocation2 + $0x100] sm:$0xff]
    %v85 = vld [vmem:[#allocation2 + $0x108] sm:$0x1]
    %v86 = vperm.slane %v85, 0
    %87 = vmatpush.msra.mxu0 %v84
    %88 = vmatpush.msra.mxu0 %v83
    %89 = vmatpush.msra.mxu0 %v82
    %90 = vmatpush.msra.mxu0 %v81
    %91 = vmatpush.msra.mxu0 %v80
    %92 = vmatpush.msra.mxu0 %v79
    %93 = vmatpush.msra.mxu0 %v78
    %94 = vmatpush.msra.mxu0 %v77
    %95 = vmatpush.msra.mxu0 %v76
    %96 = vmatpush.msra.mxu0 %v75
    %97 = vmatpush.msra.mxu0 %v74
    %98 = vmatpush.msra.mxu0 %v73
    %99 = vmatpush.msra.mxu0 %v72
    %100 = vmatpush.msra.mxu0 %v71
    %101 = vmatpush.msra.mxu0 %v70
    %102 = vmatpush.msra.mxu0 %v69
    %103 = vmatmul.f32.gmra.mxu0 %v68
    %v104 = vpop.f32.mrf.mxu0
    %v105 = vadd.f32 %v86, %v104
    %106 = vdwg.mxu0
    %v107 = vmul.f32 %v105, 0.01
    %v108 = vmax.f32 %v105, %v107
    %v109 = vld [vmem:[#allocation2 + $0x110] sm:$0xff]
    %v110 = vld [vmem:[#allocation2 + $0x118] sm:$0xff]
    %v111 = vld [vmem:[#allocation2 + $0x120] sm:$0xff]
    %v112 = vld [vmem:[#allocation2 + $0x128] sm:$0xff]
    %v113 = vld [vmem:[#allocation2 + $0x130] sm:$0xff]
    %v114 = vld [vmem:[#allocation2 + $0x138] sm:$0xff]
    %v115 = vld [vmem:[#allocation2 + $0x140] sm:$0xff]
    %v116 = vld [vmem:[#allocation2 + $0x148] sm:$0xff]
    %v117 = vld [vmem:[#allocation2 + $0x150] sm:$0xff]
    %v118 = vld [vmem:[#allocation2 + $0x158] sm:$0xff]
    %v119 = vld [vmem:[#allocation2 + $0x160] sm:$0xff]
    %v120 = vld [vmem:[#allocation2 + $0x168] sm:$0xff]
    %v121 = vld [vmem:[#allocation2 + $0x170] sm:$0xff]
    %v122 = vld [vmem:[#allocation2 + $0x178] sm:$0xff]
    %v123 = vld [vmem:[#allocation2 + $0x180] sm:$0xff]
    %v124 = vld [vmem:[#allocation2 + $0x188] sm:$0xff]
    %v125 = vld [vmem:[#allocation2 + $0x190] sm:$0x1]
    %v126 = vperm.slane %v125, 0
    %127 = vmatpush.msra.mxu0 %v124
    %128 = vmatpush.msra.mxu0 %v123
    %129 = vmatpush.msra.mxu0 %v122
    %130 = vmatpush.msra.mxu0 %v121
    %131 = vmatpush.msra.mxu0 %v120
    %132 = vmatpush.msra.mxu0 %v119
    %133 = vmatpush.msra.mxu0 %v118
    %134 = vmatpush.msra.mxu0 %v117
    %135 = vmatpush.msra.mxu0 %v116
    %136 = vmatpush.msra.mxu0 %v115
    %137 = vmatpush.msra.mxu0 %v114
    %138 = vmatpush.msra.mxu0 %v113
    %139 = vmatpush.msra.mxu0 %v112
    %140 = vmatpush.msra.mxu0 %v111
    %141 = vmatpush.msra.mxu0 %v110
    %142 = vmatpush.msra.mxu0 %v109
    %143 = vmatmul.f32.gmra.mxu0 %v108
    %v144 = vpop.f32.mrf.mxu0
    %v145 = vadd.f32 %v126, %v144
    %146 = vdwg.mxu0
    %147 = vst [vmem:[#allocation5] sm:$0xff] %v145
    // Predicated region
    $region14: #{_param_actor_forward_impl.1} parent=1 // pred_check
      _
    $region15: #{_param_actor_forward_impl.1} parent=1 // pred_check_branch
      %149 = sbr.rel (0) target = $region17
    $region16: #{_param_actor_forward_impl.1} parent=1 // pred_region
      %151 = vsyncadd [#allocation4], 0
      %s153 = sshll.u32 [#allocation5], 4
      %s154 = int_to_ptr.vmem [resolvable:$true] %s153
      %s155 = sshll.u32 %s2, 4
      %s156 = int_to_ptr.hbm [resolvable:$true] %s155
      %158 = dma.vmem_to_hbm [thread:$0]  %s154, 128, %s156, [#allocation4]
    $region17: #{_param_actor_forward_impl.1} parent=1 // pred_fallthru
      _
    // Predicated region
    $region18: #{_param_actor_forward_impl.1} parent=1 // pred_check
      _
    $region19: #{_param_actor_forward_impl.1} parent=1 // pred_check_branch
      %160 = sbr.rel (0) target = $region21
    $region20: #{_param_actor_forward_impl.1} parent=1 // pred_region
      %162 = dma.done [#allocation4], 128
    $region21: #{_param_actor_forward_impl.1} parent=1 // pred_fallthru
      _
    %163 = vsyncpa [#allocation3], 1
    %164 = vsyncpa [#allocation4], 1

</llo_original>
